<compile_context>
chip_gen: v5e
topology: v5e:2x2
jax: 0.10.0
libtpu: 0.0.40
codegen_flags: <defaults>
</compile_context>

<pallas_src>
import math

import jax
import jax.numpy as jnp
from jax.experimental import pallas as pl
from jax.experimental.pallas import tpu as pltpu

_LANE = 128
_PIPELINE_BUDGET = 24 << 20    # total double-buffered working set (all operands)
_VMEM_LIMIT = 40 << 20         # raised scoped-VMEM limit (under v7x's 64 MiB physical)
_SMALL_BYPASS_BYTES = 1 << 20  # below this, the XLA-fused add is already at roofline


def _cdiv(a, b):
    return -(-a // b)


def _sublane_multiple(*dtypes):
    """Packed-sublane multiple: 8 for 32-bit, 16 for 16-bit, 32 for 8-bit dtypes."""
    min_item = min(jnp.dtype(d).itemsize for d in dtypes)
    return 8 * max(1, 4 // min_item)


def _add_kernel(x_ref, p_ref, o_ref):
    # Promoting elementwise add; broadcasts over any size-1 leading block dim
    # (used for the batch-shared positional embedding).
    o_ref[...] = x_ref[...].astype(o_ref.dtype) + p_ref[...].astype(o_ref.dtype)


def _add_flat(x2, p2, out_dtype):
    """Elementwise add of two (M, 128) arrays (no broadcasting), row-tiled."""
    M = x2.shape[0]
    xi, pi = x2.dtype.itemsize, p2.dtype.itemsize
    oi = jnp.dtype(out_dtype).itemsize
    sub = _sublane_multiple(x2.dtype, p2.dtype, out_dtype)

    per_row = 2 * _LANE * (xi + pi + oi)              # double-buffered x/p/out per row
    cap = max(sub, (_PIPELINE_BUDGET // per_row) // sub * sub)
    tr = M if M <= cap else cap
    # v7x megacore: give a large single-tile problem >= 2 parallel grid steps.
    if tr == M and M * _LANE * oi > (2 << 20):
        half = ((M // 2) // sub) * sub
        if half >= sub:
            tr = half

    return pl.pallas_call(
        _add_kernel,
        out_shape=jax.ShapeDtypeStruct((M, _LANE), out_dtype),
        grid_spec=pltpu.PrefetchScalarGridSpec(
            num_scalar_prefetch=0,
            grid=(_cdiv(M, tr),),
            in_specs=[
                pl.BlockSpec((tr, _LANE), lambda i: (i, 0)),
                pl.BlockSpec((tr, _LANE), lambda i: (i, 0)),
            ],
            out_specs=pl.BlockSpec((tr, _LANE), lambda i: (i, 0)),
        ),
        compiler_params=pltpu.CompilerParams(
            dimension_semantics=("parallel",),
            vmem_limit_bytes=_VMEM_LIMIT,
        ),
    )(x2, p2)


def _add_bcast(x3, p3, B, out_dtype):
    """(Bx, R, 128) + (Bp, R, 128) -> (B, R, 128) with Bx/Bp in {1, B}.

    Batch broadcast is expressed via the index_map (block index 0) plus an
    in-kernel broadcast over the size-1 leading block dim — never materialized.
    """
    Bx, R = x3.shape[0], x3.shape[1]
    Bp = p3.shape[0]
    xi, pi = x3.dtype.itemsize, p3.dtype.itemsize
    oi = jnp.dtype(out_dtype).itemsize
    sub = _sublane_multiple(x3.dtype, p3.dtype, out_dtype)

    # Row tile first (assuming a batch tile of 1).
    per_row = 2 * _LANE * (xi + pi + oi)
    cap = max(sub, (_PIPELINE_BUDGET // per_row) // sub * sub)
    tr = R if R <= cap else cap

    # Batch tile: when the whole row extent fits in one tile, move several batch
    # items per grid step to amortize the fixed per-step pipeline overhead.
    tb = 1
    if tr == R and B > 1:
        scale_items = oi + (xi if Bx > 1 else 0) + (pi if Bp > 1 else 0)
        fixed_items = (xi if Bx == 1 else 0) + (pi if Bp == 1 else 0)
        per_batch = 2 * R * _LANE * scale_items
        fixed = 2 * R * _LANE * fixed_items
        tb = int(max(1, min(B, (_PIPELINE_BUDGET - fixed) // per_batch)))

    # v7x megacore: a large single-step grid would run on one TensorCore only.
    if _cdiv(R, tr) * _cdiv(B, tb) == 1 and B * R * _LANE * oi > (2 << 20):
        if B >= 2:
            tb = _cdiv(B, 2)
        else:
            half = ((R // 2) // sub) * sub
            if half >= sub:
                tr = half

    x_block = (tb if Bx > 1 else 1, tr, _LANE)
    p_block = (tb if Bp > 1 else 1, tr, _LANE)
    x_map = (lambda r, b: (b, r, 0)) if Bx > 1 else (lambda r, b: (0, r, 0))
    p_map = (lambda r, b: (b, r, 0)) if Bp > 1 else (lambda r, b: (0, r, 0))

    # Batch is the innermost grid axis: a batch-broadcast operand keeps the same
    # block index across consecutive steps, so its tile stays VMEM-resident.
    return pl.pallas_call(
        _add_kernel,
        out_shape=jax.ShapeDtypeStruct((B, R, _LANE), out_dtype),
        grid_spec=pltpu.PrefetchScalarGridSpec(
            num_scalar_prefetch=0,
            grid=(_cdiv(R, tr), _cdiv(B, tb)),
            in_specs=[
                pl.BlockSpec(x_block, x_map),
                pl.BlockSpec(p_block, p_map),
            ],
            out_specs=pl.BlockSpec((tb, tr, _LANE), lambda r, b: (b, r, 0)),
        ),
        compiler_params=pltpu.CompilerParams(
            dimension_semantics=("parallel", "parallel"),
            vmem_limit_bytes=_VMEM_LIMIT,
        ),
    )(x3, p3)


def with_pos_embd(tensor, pos=None, *, small_bypass_bytes=_SMALL_BYPASS_BYTES):
    """JAX/Pallas equivalent of WithPosEmbd.forward."""
    if pos is None:
        # self.with_pos = False -> identity
        return tensor

    tensor = jnp.asarray(tensor)
    pos = jnp.asarray(pos)
    out_dtype = jnp.result_type(tensor.dtype, pos.dtype)
    out_shape = jnp.broadcast_shapes(tensor.shape, pos.shape)
    out_elems = math.prod(out_shape) if out_shape else 1
    out_bytes = out_elems * jnp.dtype(out_dtype).itemsize

    # Small-tensor bypass: pallas_call dispatch overhead dominates here and the
    # custom call blocks XLA from fusing the add into neighbouring elementwise ops.
    if out_elems == 0 or len(out_shape) == 0 or out_bytes <= small_bypass_bytes:
        return tensor + pos

    rank = len(out_shape)
    # Rank-align with leading size-1 dims (torch broadcasting semantics).
    if tensor.ndim < rank:
        tensor = tensor.reshape((1,) * (rank - tensor.ndim) + tensor.shape)
    if pos.ndim < rank:
        pos = pos.reshape((1,) * (rank - pos.ndim) + pos.shape)

    # Only the leading (batch) broadcast is kept un-materialized; broadcasts over
    # trailing dims are rare for positional embeddings and are materialized here.
    # TODO(synk): express trailing-dim broadcasts via size-1 block dims in-kernel.
    if rank >= 2:
        B, inner = out_shape[0], tuple(out_shape[1:])
        if tensor.shape[1:] != inner:
            tensor = jnp.broadcast_to(tensor, (tensor.shape[0],) + inner)
        if pos.shape[1:] != inner:
            pos = jnp.broadcast_to(pos, (pos.shape[0],) + inner)
        Tb, Pb = tensor.shape[0], pos.shape[0]
    else:
        B, inner = 1, tuple(out_shape)
        tensor = jnp.broadcast_to(tensor, inner).reshape((1,) + inner)
        pos = jnp.broadcast_to(pos, inner).reshape((1,) + inner)
        Tb = Pb = 1

    N = math.prod(inner)
    x2 = tensor.reshape(Tb, N)
    p2 = pos.reshape(Pb, N)

    n_orig = N
    if N % _LANE != 0:
        # Pad to a full lane width: avoids an ultra-wide (1, 1, N) block (masked
        # partial stores, huge VMEM footprint) for non-128-multiple shapes.
        n_pad = _cdiv(N, _LANE) * _LANE
        x2 = jnp.pad(x2, ((0, 0), (0, n_pad - N)))
        p2 = jnp.pad(p2, ((0, 0), (0, n_pad - N)))
        N = n_pad

    R = N // _LANE
    if Tb == B and Pb == B:
        # No batch broadcast: flatten batch into rows for maximal contiguous DMAs.
        out = _add_flat(x2.reshape(B * R, _LANE), p2.reshape(B * R, _LANE), out_dtype)
    else:
        out = _add_bcast(x2.reshape(Tb, R, _LANE), p2.reshape(Pb, R, _LANE), B, out_dtype)

    out = out.reshape(B, N)
    if n_orig != N:
        out = out[:, :n_orig]
    return out.reshape(out_shape)


if __name__ == "__main__":
    key = jax.random.PRNGKey(0)
    k_x, k_p = jax.random.split(key)

    B, S, D = 2, 8, 32  # batch=2, seq=8, hidden=32

    x = jax.random.normal(k_x, (B, S, D), dtype=jnp.float32)
    pos = jax.random.normal(k_p, (1, S, D), dtype=jnp.float32)  # shared pos embedding

    # Case 1: pos is None -> pure pass-through.
    out_none = jax.block_until_ready(with_pos_embd(x, None))
    assert out_none.shape == (B, S, D) and jnp.allclose(out_none, x)

    # Case 2: small shape, default path -> XLA-fused add bypass.
    ref = x + pos
    out_small = jax.block_until_ready(with_pos_embd(x, pos))
    assert out_small.shape == (B, S, D) and jnp.allclose(out_small, ref, atol=1e-6)

    # Case 3: same shape forced through the Pallas kernel (shared-pos broadcast path).
    out_k = jax.block_until_ready(with_pos_embd(x, pos, small_bypass_bytes=0))
    assert out_k.dtype == ref.dtype
    assert jnp.allclose(out_k, ref, atol=1e-6, rtol=1e-6)

    # Case 4: mixed precision + per-batch pos -> flattened (rows, 128) kernel path.
    x_bf16 = x.astype(jnp.bfloat16)
    pos_full = jax.random.normal(key, (B, S, D), dtype=jnp.float32)
    out_mixed = jax.block_until_ready(
        with_pos_embd(x_bf16, pos_full, small_bypass_bytes=0))
    ref_mixed = x_bf16.astype(jnp.float32) + pos_full
    assert out_mixed.dtype == jnp.float32
    assert jnp.allclose(out_mixed, ref_mixed, atol=1e-2, rtol=1e-2)

    # Case 5: inner size not a multiple of 128 -> pad-to-128 kernel path.
    x_odd = jax.random.normal(k_x, (B, 5, 30), dtype=jnp.float32)
    pos_odd = jax.random.normal(k_p, (1, 5, 30), dtype=jnp.float32)
    out_odd = jax.block_until_ready(with_pos_embd(x_odd, pos_odd, small_bypass_bytes=0))
    assert jnp.allclose(out_odd, x_odd + pos_odd, atol=1e-6, rtol=1e-6)

    # Case 6: moderately sized tensor -> batch-tiled, multi-step "parallel" grid
    # (exercises the v7x megacore split; runs the kernel without forcing).
    x_big = jax.random.normal(k_x, (4, 1024, 256), dtype=jnp.float32)
    pos_big = jax.random.normal(k_p, (1, 1024, 256), dtype=jnp.float32)
    out_big = jax.block_until_ready(with_pos_embd(x_big, pos_big))
    assert jnp.allclose(out_big, x_big + pos_big, atol=1e-6, rtol=1e-6)

    print("KERNEL_OK")
</pallas_src>

<mosaic_0001>
module attributes {stable_mosaic.version = 11 : i64} {
  func.func @_add_kernel(%arg0: i32, %arg1: i32, %arg2: memref<2x2x128xf32, #tpu.memory_space<vmem>>, %arg3: memref<1x2x128xf32, #tpu.memory_space<vmem>>, %arg4: memref<2x2x128xf32, #tpu.memory_space<vmem>>) attributes {dimension_semantics = [#tpu.dimension_semantics<parallel>, #tpu.dimension_semantics<parallel>], iteration_bounds = array<i64: 1, 1>, scalar_prefetch = 0 : i64, scratch_operands = 0 : i64, tpu.core_type = #tpu.core_type<tc>, window_params = [{transform_indices = @transform_0, window_bounds = array<i64: 2, 2, 128>}, {transform_indices = @transform_1, window_bounds = array<i64: 1, 2, 128>}, {transform_indices = @transform_2, window_bounds = array<i64: 2, 2, 128>}]} {
    %c0 = arith.constant 0 : index
    %c0_0 = arith.constant 0 : index
    %c0_1 = arith.constant 0 : index
    %0 = vector.load %arg2[%c0, %c0_0, %c0_1] : memref<2x2x128xf32, #tpu.memory_space<vmem>>, vector<2x2x128xf32>
    %c0_2 = arith.constant 0 : index
    %c0_3 = arith.constant 0 : index
    %c0_4 = arith.constant 0 : index
    %1 = vector.load %arg3[%c0_2, %c0_3, %c0_4] : memref<1x2x128xf32, #tpu.memory_space<vmem>>, vector<1x2x128xf32>
    %2 = vector.broadcast %1 : vector<1x2x128xf32> to vector<2x2x128xf32>
    %3 = arith.addf %0, %2 : vector<2x2x128xf32>
    %c0_5 = arith.constant 0 : index
    %c0_6 = arith.constant 0 : index
    %c0_7 = arith.constant 0 : index
    %4 = vector.load %arg4[%c0_5, %c0_6, %c0_7] : memref<2x2x128xf32, #tpu.memory_space<vmem>>, vector<2x2x128xf32>
    tpu.vector_store %arg4[%c0_5, %c0_6, %c0_7], %3 {strides = array<i32>} : memref<2x2x128xf32, #tpu.memory_space<vmem>>, vector<2x2x128xf32>,
    return
  }
  func.func @transform_0(%arg0: i32, %arg1: i32) -> (i32, i32, i32) {
    %c0_i32 = arith.constant 0 : i32
    %c0_i32_0 = arith.constant 0 : i32
    return %arg1, %arg0, %c0_i32 : i32, i32, i32
  }
  func.func @transform_1(%arg0: i32, %arg1: i32) -> (i32, i32, i32) {
    %c0_i32 = arith.constant 0 : i32
    %c0_i32_0 = arith.constant 0 : i32
    %c0_i32_1 = arith.constant 0 : i32
    return %c0_i32, %arg0, %c0_i32_0 : i32, i32, i32
  }
  func.func @transform_2(%arg0: i32, %arg1: i32) -> (i32, i32, i32) {
    %c0_i32 = arith.constant 0 : i32
    %c0_i32_0 = arith.constant 0 : i32
    return %arg1, %arg0, %c0_i32 : i32, i32, i32
  }
}

</mosaic_0001>

<llo_original>
// kernel: tpu_custom_call.1
$region0: #{tpu_custom_call.1}
  #allocation0 [shape = 'u32[]', space=smem, size = 0x4, offset = 0x4, fixed_abs, tag = 'smem constant byte address 0x4 - core index']
  #allocation1 [shape = 'u32[72,128]{1,0:T(1,128)}', space=vmem, size = 0x9000, scoped, tag = 'internal scratch']
  %s0 = inlined_call_operand.hbm [shape: f32[2,2,128], index: 0, kind: input, shape index: {}]
  %s1 = inlined_call_operand.hbm [shape: f32[1,2,128], index: 1, kind: input, shape index: {}]
  %s2 = inlined_call_operand.hbm [shape: f32[2,2,128], index: 2, kind: output, shape index: {}]
  %s3 = sld [smem:[#allocation0]]
  $region26: #{tpu_custom_call.1} parent=0
    _
  %s5 = ssub.s32 1, %s3
  %s6 = scalar_select 0, %s5, %s3
  $region1: #{tpu_custom_call.1} parent=0
    #allocation2 [shape = 'u8[2048]{0}', space=vmem, size = 0x800, scoped, tag = 'input window, operand 0, single buffered']
    #allocation3 [shape = 's32[1]{0}', space=sflag, size = 0x4, scoped, tag = 'scoped memory for tpu_custom_call.1']
    #allocation4 [shape = 's32[1]{0}', space=sflag, size = 0x4, scoped, tag = 'scoped memory for tpu_custom_call.1']
    #allocation5 [shape = 'u8[1024]{0}', space=vmem, size = 0x400, scoped, tag = 'input window, operand 1, single buffered']
    #allocation6 [shape = 's32[1]{0}', space=sflag, size = 0x4, scoped, tag = 'scoped memory for tpu_custom_call.1']
    #allocation7 [shape = 'u8[2048]{0}', space=vmem, size = 0x800, scoped, tag = 'output window, operand 0, single buffered']
    %7 = vsyncpa [#allocation3], 0
    %8 = vsyncpa [#allocation6], 0
    %9 = vsyncpa [#allocation4], 0
    // Predicated region
    $region2: #{tpu_custom_call.1} parent=1 // pred_check
      _
    $region3: #{tpu_custom_call.1} parent=1 // pred_check_branch
      %11 = sbr.rel (0) target = $region5
    $region4: #{tpu_custom_call.1} parent=1 // pred_region
      %13 = vsyncadd [#allocation3], 0
      %s14 = sshll.u32 %s0, 4
      %s15 = int_to_ptr.hbm [resolvable:$true] %s14
      %s16 = sshll.u32 [#allocation2], 4
      %s17 = int_to_ptr.vmem [resolvable:$true] %s16
      %22 = dma.hbm_to_vmem [thread:$0]  %s15, 64, %s17, [#allocation3], 32, 32, 2
    $region5: #{tpu_custom_call.1} parent=1 // pred_fallthru
      _
    // Predicated region
    $region6: #{tpu_custom_call.1} parent=1 // pred_check
      _
    $region7: #{tpu_custom_call.1} parent=1 // pred_check_branch
      %24 = sbr.rel (0) target = $region9
    $region8: #{tpu_custom_call.1} parent=1 // pred_region
      %26 = vsyncadd [#allocation6], 0
      %s28 = sshll.u32 %s1, 4
      %s29 = int_to_ptr.hbm [resolvable:$true] %s28
      %s30 = sshll.u32 [#allocation5], 4
      %s31 = int_to_ptr.vmem [resolvable:$true] %s30
      %33 = dma.hbm_to_vmem [thread:$0]  %s29, 32, %s31, [#allocation6]
    $region9: #{tpu_custom_call.1} parent=1 // pred_fallthru
      _
    // Predicated region
    $region10: #{tpu_custom_call.1} parent=1 // pred_check
      _
    $region11: #{tpu_custom_call.1} parent=1 // pred_check_branch
      %35 = sbr.rel (0) target = $region13
    $region12: #{tpu_custom_call.1} parent=1 // pred_region
      %37 = dma.done [#allocation3], 64
    $region13: #{tpu_custom_call.1} parent=1 // pred_fallthru
      _
    // Predicated region
    $region14: #{tpu_custom_call.1} parent=1 // pred_check
      _
    $region15: #{tpu_custom_call.1} parent=1 // pred_check_branch
      %39 = sbr.rel (0) target = $region17
    $region16: #{tpu_custom_call.1} parent=1 // pred_region
      %41 = dma.done [#allocation6], 32
    $region17: #{tpu_custom_call.1} parent=1 // pred_fallthru
      _
    %v42 = vld [vmem:[#allocation2] sm:$0x3]
    %v43 = vld [vmem:[#allocation2 + $0x2] sm:$0x3]
    %v44 = vld [vmem:[#allocation5] sm:$0x3]
    %v45 = vadd.f32 %v42, %v44
    %v46 = vadd.f32 %v43, %v44
    %47 = vst [vmem:[#allocation7] sm:$0x3] %v45
    %48 = vst [vmem:[#allocation7 + $0x2] sm:$0x3] %v46
    // Predicated region
    $region18: #{tpu_custom_call.1} parent=1 // pred_check
      _
    $region19: #{tpu_custom_call.1} parent=1 // pred_check_branch
      %50 = sbr.rel (0) target = $region21
    $region20: #{tpu_custom_call.1} parent=1 // pred_region
      %52 = vsyncadd [#allocation4], 0
      %s53 = sshll.u32 [#allocation7], 4
      %s54 = int_to_ptr.vmem [resolvable:$true] %s53
      %s55 = sshll.u32 %s2, 4
      %s56 = int_to_ptr.hbm [resolvable:$true] %s55
      %61 = dma.vmem_to_hbm [thread:$0]  %s54, 64, %s56, [#allocation4], 32, 32, 2
    $region21: #{tpu_custom_call.1} parent=1 // pred_fallthru
      _
    // Predicated region
    $region22: #{tpu_custom_call.1} parent=1 // pred_check
      _
    $region23: #{tpu_custom_call.1} parent=1 // pred_check_branch
      %63 = sbr.rel (0) target = $region25
    $region24: #{tpu_custom_call.1} parent=1 // pred_region
      %65 = dma.done [#allocation4], 64
    $region25: #{tpu_custom_call.1} parent=1 // pred_fallthru
      _
    %66 = vsyncpa [#allocation3], 1
    %67 = vsyncpa [#allocation6], 1
    %68 = vsyncpa [#allocation4], 1

</llo_original>
